<compile_context>
chip_gen: v6e
topology: v6e:2x2x1
jax: 0.10.0
libtpu: 0.0.40
codegen_flags: <defaults>
</compile_context>

<pallas_src>
import jax
import jax.numpy as jnp
from jax.experimental import pallas as pl
from jax.experimental.pallas import tpu as pltpu

LANES = 128          # vreg lane width (same on v5e / v6e / v7x)
DEFAULT_TILE_ROWS = 1024  # (1024, 128) f32 block = 512 KiB; 2x in + 2x out
                          # double-buffered ~= 2 MiB -> fits v7x's smaller
                          # VMEM comfortably and is near HBM roofline on all gens.


def _linear11_kernel(w_ref, b_ref, x_ref, o_ref):
    # w_ref: (1, 1) SMEM, b_ref: (1,) SMEM, x_ref/o_ref: (block_rows, 128) VMEM
    o_ref[...] = x_ref[...] * w_ref[0, 0] + b_ref[0]


def dummy_model_forward(x, weight, bias, tile_rows=DEFAULT_TILE_ROWS):
    """Pallas equivalent of nn.Linear(1, 1)(x).

    x:      (N, 1) float32
    weight: (1, 1) float32   (PyTorch Linear weight, out x in)
    bias:   (1,)   float32
    returns (N, 1) float32
    """
    n = x.shape[0]
    dtype = x.dtype

    # --- lane-dense layout plumbing (wrapper side, not compute) -------------
    rows = pl.cdiv(n, LANES)                      # rows of a (rows, 128) slab
    if rows >= tile_rows:
        block_rows = tile_rows
    else:
        # Small input: single full-extent block (legal even if rows % 8 != 0
        # because block dim == full array dim). Still lane-dense.
        block_rows = rows
    rows_padded = ((rows + block_rows - 1) // block_rows) * block_rows
    padded_len = rows_padded * LANES

    x_flat = jnp.pad(x.reshape(-1), (0, padded_len - n))
    x_slab = x_flat.reshape(rows_padded, LANES)

    grid = (rows_padded // block_rows,)

    out_slab = pl.pallas_call(
        _linear11_kernel,
        out_shape=jax.ShapeDtypeStruct((rows_padded, LANES), dtype),
        grid=grid,
        in_specs=[
            pl.BlockSpec(memory_space=pltpu.SMEM),                 # weight (1,1)
            pl.BlockSpec(memory_space=pltpu.SMEM),                 # bias (1,)
            pl.BlockSpec((block_rows, LANES), lambda i: (i, 0)),   # x slab tile
        ],
        out_specs=pl.BlockSpec((block_rows, LANES), lambda i: (i, 0)),
        compiler_params=pltpu.CompilerParams(
            # Row-tile axis is independent -> shard across v7x's 2 TensorCores;
            # harmless on v5e/v6e single-TC chips.
            dimension_semantics=("parallel",),
        ),
    )(weight, bias, x_slab)

    # Drop the pad tail and restore (N, 1).
    return out_slab.reshape(-1)[:n].reshape(n, 1)


if __name__ == "__main__":
    key = jax.random.PRNGKey(0)
    k_w, k_b, k_x, k_x2 = jax.random.split(key, 4)

    # Deterministic parameter init (shapes from nn.Linear(1, 1)).
    weight = jax.random.normal(k_w, (1, 1), dtype=jnp.float32)
    bias = jax.random.normal(k_b, (1,), dtype=jnp.float32)

    # Small input consistent with the module: batch=8, features=1.
    x = jax.random.normal(k_x, (8, 1), dtype=jnp.float32)
    y = jax.block_until_ready(dummy_model_forward(x, weight, bias))
    y_ref = x @ weight.T + bias
    assert y.shape == (8, 1)
    assert jnp.allclose(y, y_ref, atol=1e-6), "mismatch vs reference (N=8)"

    # Second check: N not a multiple of 128 exercises pad + slice-back path.
    x2 = jax.random.normal(k_x2, (300, 1), dtype=jnp.float32)
    y2 = jax.block_until_ready(dummy_model_forward(x2, weight, bias))
    y2_ref = x2 @ weight.T + bias
    assert y2.shape == (300, 1)
    assert jnp.allclose(y2, y2_ref, atol=1e-6), "mismatch vs reference (N=300)"

    print("KERNEL_OK")
</pallas_src>

<mosaic_0001>
module attributes {stable_mosaic.version = 11 : i64} {
  func.func @_linear11_kernel(%arg0: i32, %arg1: memref<1x1xf32, #tpu.memory_space<smem>>, %arg2: memref<1xf32, #tpu.memory_space<smem>>, %arg3: memref<1x128xf32, #tpu.memory_space<vmem>>, %arg4: memref<1x128xf32, #tpu.memory_space<vmem>>) attributes {dimension_semantics = [#tpu.dimension_semantics<parallel>], iteration_bounds = array<i64: 1>, scalar_prefetch = 0 : i64, scratch_operands = 0 : i64, tpu.core_type = #tpu.core_type<tc>, window_params = [{transform_indices = @transform_0, window_bounds = array<i64: 1, 1>}, {transform_indices = @transform_1, window_bounds = array<i64: 1>}, {transform_indices = @transform_2, window_bounds = array<i64: 1, 128>}, {transform_indices = @transform_3, window_bounds = array<i64: 1, 128>}]} {
    %c0 = arith.constant 0 : index
    %c0_0 = arith.constant 0 : index
    %0 = vector.load %arg3[%c0, %c0_0] : memref<1x128xf32, #tpu.memory_space<vmem>>, vector<1x128xf32>
    %c0_1 = arith.constant 0 : index
    %c0_2 = arith.constant 0 : index
    %1 = memref.load %arg1[%c0_1, %c0_2] : memref<1x1xf32, #tpu.memory_space<smem>>
    %2 = vector.broadcast %1 : f32 to vector<1x128xf32>
    %3 = arith.mulf %0, %2 : vector<1x128xf32>
    %c0_3 = arith.constant 0 : index
    %4 = memref.load %arg2[%c0_3] : memref<1xf32, #tpu.memory_space<smem>>
    %5 = vector.broadcast %4 : f32 to vector<1x128xf32>
    %6 = arith.addf %3, %5 : vector<1x128xf32>
    %c0_4 = arith.constant 0 : index
    %c0_5 = arith.constant 0 : index
    %7 = vector.load %arg4[%c0_4, %c0_5] : memref<1x128xf32, #tpu.memory_space<vmem>>, vector<1x128xf32>
    tpu.vector_store %arg4[%c0_4, %c0_5], %6 {strides = array<i32>} : memref<1x128xf32, #tpu.memory_space<vmem>>, vector<1x128xf32>,
    return
  }
  func.func @transform_0(%arg0: i32) -> (i32, i32) {
    %c0_i32 = arith.constant 0 : i32
    %c0_i32_0 = arith.constant 0 : i32
    %c0_i32_1 = arith.constant 0 : i32
    return %c0_i32, %c0_i32_0 : i32, i32
  }
  func.func @transform_1(%arg0: i32) -> i32 {
    %c0_i32 = arith.constant 0 : i32
    %c0_i32_0 = arith.constant 0 : i32
    return %c0_i32 : i32
  }
  func.func @transform_2(%arg0: i32) -> (i32, i32) {
    %c0_i32 = arith.constant 0 : i32
    %c0_i32_0 = arith.constant 0 : i32
    return %arg0, %c0_i32 : i32, i32
  }
  func.func @transform_3(%arg0: i32) -> (i32, i32) {
    %c0_i32 = arith.constant 0 : i32
    %c0_i32_0 = arith.constant 0 : i32
    return %arg0, %c0_i32 : i32, i32
  }
}

</mosaic_0001>

<llo_original>
// kernel: tpu_custom_call.1
$region0: #{tpu_custom_call.1}
  #allocation0 [shape = 'u32[]', space=smem, size = 0x4, offset = 0x4, fixed_abs, tag = 'smem constant byte address 0x4 - core index']
  #allocation1 [shape = 'u32[144,128]{1,0:T(1,128)}', space=vmem, size = 0x12000, scoped, tag = 'internal scratch']
  #allocation2 [shape = 'f32[1,1]{1,0:T(1,128)S(6)}', space=smem, size = 0x200, scoped, tag = 'scoped memory for tpu_custom_call.1']
  #allocation3 [shape = 'f32[1]{0:T(128)S(6)}', space=smem, size = 0x200, scoped, tag = 'scoped memory for tpu_custom_call.1']
  %s0 = inlined_call_operand.<no memory space> [shape: f32[1,1], index: 0, kind: input, shape index: {}]
  %s1 = inlined_call_operand.<no memory space> [shape: f32[1], index: 1, kind: input, shape index: {}]
  %s2 = inlined_call_operand.vmem [shape: f32[1,128], index: 2, kind: input, shape index: {}]
  %s3 = inlined_call_operand.hbm [shape: f32[1,128], index: 3, kind: output, shape index: {}]
  %s4 = sld [smem:[#allocation0]]
  $region22: #{tpu_custom_call.1} parent=0
    _
  %s6 = ssub.s32 1, %s4
  %s7 = scalar_select 0, %s6, %s4
  %8 = sst [smem:[#allocation2]] %s0
  %9 = sst [smem:[#allocation3]] %s1
  $region1: #{tpu_custom_call.1} parent=0
    #allocation4 [shape = 'u8[512]{0}', space=vmem, size = 0x400, scoped, tag = 'output window, operand 0, single buffered']
    #allocation5 [shape = 's32[1]{0}', space=sflag, size = 0x4, scoped, tag = 'scoped memory for tpu_custom_call.1']
    %10 = vsyncpa [#allocation5], 0
    // Predicated region
    $region2: #{tpu_custom_call.1} parent=1 // pred_check
      _
    $region3: #{tpu_custom_call.1} parent=1 // pred_check_branch
      %12 = sbr.rel (0) target = $region5
    $region4: #{tpu_custom_call.1} parent=1 // pred_region
      _
    $region5: #{tpu_custom_call.1} parent=1 // pred_fallthru
      _
    // Predicated region
    $region6: #{tpu_custom_call.1} parent=1 // pred_check
      _
    $region7: #{tpu_custom_call.1} parent=1 // pred_check_branch
      %14 = sbr.rel (0) target = $region9
    $region8: #{tpu_custom_call.1} parent=1 // pred_region
      _
    $region9: #{tpu_custom_call.1} parent=1 // pred_fallthru
      _
    // Predicated region
    $region10: #{tpu_custom_call.1} parent=1 // pred_check
      _
    $region11: #{tpu_custom_call.1} parent=1 // pred_check_branch
      %16 = sbr.rel (0) target = $region13
    $region12: #{tpu_custom_call.1} parent=1 // pred_region
      _
    $region13: #{tpu_custom_call.1} parent=1 // pred_fallthru
      _
    %v17 = vld [vmem:[%s2] sm:$0x1]
    %s18 = sld [smem:[#allocation2]]
    %v19 = vstv %s18
    %v20 = vmul.f32 %v17, %v19
    %s21 = sld [smem:[#allocation3]]
    %v22 = vstv %s21
    %v23 = vadd.f32 %v20, %v22
    %24 = vst [vmem:[#allocation4] sm:$0x1] %v23
    // Predicated region
    $region14: #{tpu_custom_call.1} parent=1 // pred_check
      _
    $region15: #{tpu_custom_call.1} parent=1 // pred_check_branch
      %26 = sbr.rel (0) target = $region17
    $region16: #{tpu_custom_call.1} parent=1 // pred_region
      %s28 = ssub.s32 16, 16
      %29 = vsyncadd [#allocation5], %s28
      %s31 = sshll.u32 [#allocation4], 4
      %s32 = int_to_ptr.vmem [resolvable:$true] %s31
      %34 = dma.vmem_to_hbm [thread:$0]  %s32, 16, %s3, [#allocation5]
    $region17: #{tpu_custom_call.1} parent=1 // pred_fallthru
      _
    // Predicated region
    $region18: #{tpu_custom_call.1} parent=1 // pred_check
      _
    $region19: #{tpu_custom_call.1} parent=1 // pred_check_branch
      %36 = sbr.rel (0) target = $region21
    $region20: #{tpu_custom_call.1} parent=1 // pred_region
      %37 = dma.done [#allocation5], 16
    $region21: #{tpu_custom_call.1} parent=1 // pred_fallthru
      _
    %38 = vsyncpa [#allocation5], 1

</llo_original>
